<compile_context>
chip_gen: v5e
topology: v5e:2x2
jax: 0.10.0
libtpu: 0.0.40
codegen_flags: <defaults>
</compile_context>

<pallas_src>
import functools

import numpy as np
import jax
import jax.numpy as jnp
from jax import lax
from jax.experimental import pallas as pl
from jax.experimental.pallas import tpu as pltpu

LANE = 128
SUBLANE = 8


def _to_i32(x):
    """Python int -> two's-complement int32-range Python int."""
    x &= 0xFFFFFFFF
    return x - (1 << 32) if x >= (1 << 31) else x


# lowbias32 hash constants (Chris Wellons).
_H1 = _to_i32(0x7FEB352D)
_H2 = _to_i32(0x846CA68B)


def _mix_py(x):
    """Host-side lowbias32 (derives the per-call seed constant)."""
    x &= 0xFFFFFFFF
    x ^= x >> 16
    x = (x * 0x7FEB352D) & 0xFFFFFFFF
    x ^= x >> 15
    x = (x * 0x846CA68B) & 0xFFFFFFFF
    x ^= x >> 16
    return x


def _srl(x, k):
    """Logical right shift of an int32 array by static k >= 1 (jnp ops only)."""
    mask = np.int32((1 << (32 - k)) - 1)
    return (x >> k) & mask


def _hash32(x):
    """lowbias32: well-mixed 32-bit integer hash (int32 in, int32 out)."""
    x = x ^ _srl(x, 16)
    x = x * np.int32(_H1)
    x = x ^ _srl(x, 15)
    x = x * np.int32(_H2)
    x = x ^ _srl(x, 16)
    return x


def _ndtri(p):
    """Inverse standard-normal CDF (Acklam's rational approximation).

    Valid for p in (0, 1).  Uses only log/sqrt/mul/add/div/where, all of which
    lower cleanly on Mosaic (and run in interpret mode).
    """
    a1, a2, a3 = -3.969683028665376e+01, 2.209460984245205e+02, -2.759285104469687e+02
    a4, a5, a6 = 1.383577518672690e+02, -3.066479806614716e+01, 2.506628277459239e+00
    b1, b2, b3 = -5.447609879822406e+01, 1.615858368580409e+02, -1.556989798598866e+02
    b4, b5 = 6.680131188771972e+01, -1.328068155288572e+01
    c1, c2, c3 = -7.784894002430293e-03, -3.223964580411365e-01, -2.400758277161838e+00
    c4, c5, c6 = -2.549732539343734e+00, 4.374664141464968e+00, 2.938163982698783e+00
    d1, d2 = 7.784695709041462e-03, 3.224671290700398e-01
    d3, d4 = 2.445134137142996e+00, 3.754408661907416e+00
    p_low = 0.02425

    # Central region.
    q = p - 0.5
    r = q * q
    x_c = ((((((a1 * r + a2) * r + a3) * r + a4) * r + a5) * r + a6) * q) / \
          (((((b1 * r + b2) * r + b3) * r + b4) * r + b5) * r + 1.0)
    # Lower tail.
    ql = jnp.sqrt(-2.0 * jnp.log(p))
    x_l = (((((c1 * ql + c2) * ql + c3) * ql + c4) * ql + c5) * ql + c6) / \
          ((((d1 * ql + d2) * ql + d3) * ql + d4) * ql + 1.0)
    # Upper tail.
    omp = 1.0 - p
    qu = jnp.sqrt(-2.0 * jnp.log(omp))
    x_u = -(((((c1 * qu + c2) * qu + c3) * qu + c4) * qu + c5) * qu + c6) / \
          ((((d1 * qu + d2) * qu + d3) * qu + d4) * qu + 1.0)

    return jnp.where(p < p_low, x_l, jnp.where(omp < p_low, x_u, x_c))


def _rsample_kernel(mu_ref, rho_ref, out_ref, *, s_blk, r_blk, rows_padded,
                    seed_mix, two_d_grid):
    # mu_ref/rho_ref: (R_BLK, LANE); out_ref: (S_BLK, R_BLK, LANE).
    if two_d_grid:
        r_idx = pl.program_id(0)
        s_idx = pl.program_id(1)
    else:
        r_idx = 0
        s_idx = pl.program_id(0)

    mu = mu_ref[...].astype(jnp.float32)
    rho = rho_ref[...].astype(jnp.float32)
    # softplus(rho), computed once per grid step (amortized over S_BLK samples).
    std = jnp.maximum(rho, 0.0) + jnp.log(1.0 + jnp.exp(-jnp.abs(rho)))

    # Global element index within one sample (independent of blocking).
    row_iota = lax.broadcasted_iota(jnp.int32, (r_blk, LANE), 0)
    lane_iota = lax.broadcasted_iota(jnp.int32, (r_blk, LANE), 1)
    elem_idx = (row_iota + r_idx * r_blk) * LANE + lane_iota
    stride = _to_i32(rows_padded * LANE)
    sample0 = s_idx * s_blk
    seed_c = np.int32(seed_mix)

    def body(i, carry):
        # eps = f(seed, global output index): same stream for any tiling or
        # TPU generation.  Counter arithmetic wraps mod 2^32 (fine for a hash).
        ctr = elem_idx + (sample0 + i) * stride
        bits = _hash32(ctr ^ seed_c)
        u = _srl(bits, 9).astype(jnp.float32)        # top 23 bits, in [0, 2^23)
        p = (u + 0.5) * np.float32(2.0 ** -23)       # uniform, strictly in (0,1)
        eps = _ndtri(p)
        out_ref[i] = (mu + std * eps).astype(out_ref.dtype)
        return carry

    lax.fori_loop(0, s_blk, body, 0)


def _largest_divisor(total, cap, multiple):
    """Largest d <= cap dividing `total`, d a multiple of `multiple`."""
    cap = max(multiple, min(cap, total))
    d = (cap // multiple) * multiple
    while d >= multiple:
        if total % d == 0:
            return d
        d -= multiple
    return multiple


def gaussian_rsample(mu, rho, n_samples, seed):
    """out[s] = mu + softplus(rho) * eps[s], eps ~ N(0,1) drawn in-kernel."""
    assert mu.shape == rho.shape
    shape = mu.shape
    n = int(np.prod(shape)) if shape else 1
    out_dtype = mu.dtype                 # keep caller dtype (bf16 works too)
    itemsize = jnp.dtype(out_dtype).itemsize

    # Lane-dense (rows, 128) layout; pad only when the size isn't 8*128-aligned.
    rows = pl.cdiv(n, LANE)
    rows_padded = ((rows + SUBLANE - 1) // SUBLANE) * SUBLANE
    padded_n = rows_padded * LANE
    needs_pad = padded_n != n

    mu_flat = mu.reshape(-1)
    rho_flat = rho.reshape(-1)
    if needs_pad:
        mu_flat = jnp.pad(mu_flat, (0, padded_n - n))
        rho_flat = jnp.pad(rho_flat, (0, padded_n - n))
    mu2d = mu_flat.reshape(rows_padded, LANE)
    rho2d = rho_flat.reshape(rows_padded, LANE)

    # --- Block sizing (store-bound kernel: big, contiguous output blocks) ---
    # Whole parameter per row-block when it is <= 512 KiB: output blocks are
    # then fully contiguous in HBM and mu/rho are DMA'd exactly once.
    PARAM_BLK_BYTES = 512 << 10
    TARGET_OUT_BYTES = 6 << 20           # ~4-8 MiB output blocks
    if rows_padded * LANE * itemsize <= PARAM_BLK_BYTES:
        R_BLK = rows_padded
    else:
        row_cap = max(SUBLANE, PARAM_BLK_BYTES // (LANE * itemsize))
        R_BLK = _largest_divisor(rows_padded, row_cap, SUBLANE)
    num_r = rows_padded // R_BLK

    row_blk_bytes = R_BLK * LANE * itemsize
    S_BLK = int(max(1, min(n_samples, TARGET_OUT_BYTES // row_blk_bytes)))
    num_s = pl.cdiv(n_samples, S_BLK)
    # Expose >= 2 blocks on a parallel axis (v7x megacore) whenever possible.
    if num_r == 1 and num_s == 1 and n_samples > 1:
        S_BLK = pl.cdiv(n_samples, 2)
        num_s = pl.cdiv(n_samples, S_BLK)

    # VMEM budget: double-buffered output block + double-buffered mu/rho blocks
    # + per-slab temporaries from the in-kernel loop.  Capped at 48 MiB so it
    # stays safe on v7x (64 MiB physical per TensorCore).
    out_blk_bytes = S_BLK * R_BLK * LANE * itemsize
    slab_tmp_bytes = 16 * R_BLK * LANE * 4
    vmem_limit = int(min(48 << 20,
                         max(16 << 20,
                             2 * out_blk_bytes + 4 * row_blk_bytes
                             + slab_tmp_bytes + (4 << 20))))

    seed_mix = _to_i32(_mix_py(int(seed)))

    kernel = functools.partial(
        _rsample_kernel, s_blk=S_BLK, r_blk=R_BLK, rows_padded=rows_padded,
        seed_mix=seed_mix, two_d_grid=(num_r > 1))

    if num_r > 1:
        # Row blocks outer (mu/rho resident across the inner sample loop).
        grid = (num_r, num_s)
        in_spec = pl.BlockSpec((R_BLK, LANE), lambda r, s: (r, 0))
        out_spec = pl.BlockSpec((S_BLK, R_BLK, LANE), lambda r, s: (s, r, 0))
        dim_sem = ("parallel", "parallel")
    else:
        # Whole parameter per block: 1-D grid over sample blocks so the
        # splittable parallel axis has extent >= 2 on megacore parts.
        grid = (num_s,)
        in_spec = pl.BlockSpec((R_BLK, LANE), lambda s: (0, 0))
        out_spec = pl.BlockSpec((S_BLK, R_BLK, LANE), lambda s: (s, 0, 0))
        dim_sem = ("parallel",)

    out3d = pl.pallas_call(
        kernel,
        out_shape=jax.ShapeDtypeStruct((n_samples, rows_padded, LANE), out_dtype),
        grid=grid,
        in_specs=[in_spec, in_spec],
        out_specs=out_spec,
        compiler_params=pltpu.CompilerParams(
            dimension_semantics=dim_sem,
            vmem_limit_bytes=vmem_limit),
    )(mu2d, rho2d)

    out = out3d.reshape(n_samples, padded_n)
    if needs_pad:
        # Only taken when the parameter size is not a multiple of 8*128.
        out = out[:, :n]
    return out.reshape((n_samples,) + tuple(shape))


if __name__ == "__main__":
    key = jax.random.PRNGKey(0)

    # Parameter shape (module's __init__ takes an arbitrary tensor; pick a 2-D
    # weight whose size is a multiple of 8*128 so the no-pad fast path is used).
    P0, P1 = 32, 128
    n_samples = 8

    # Deterministic parameter init (mirrors nn.Parameter(parameter)).
    mu = jax.random.normal(key, (P0, P1), dtype=jnp.float32) * 0.1
    # rho initialized to log(expm1(0.01)), same as torch.full_like(...).
    rho = jnp.full((P0, P1), float(np.log(np.expm1(0.01))), dtype=jnp.float32)

    out = gaussian_rsample(mu, rho, n_samples, seed=42)
    out = jax.block_until_ready(out)
    assert out.shape == (n_samples, P0, P1)

    out_np = np.asarray(out)
    assert np.all(np.isfinite(out_np))

    # Reconstruct eps = (out - mu) / softplus(rho) and check it is ~N(0,1).
    std_ref = np.asarray(jax.nn.softplus(rho))
    eps_hat = (out_np - np.asarray(mu)[None]) / std_ref[None]
    m, s = float(eps_hat.mean()), float(eps_hat.std())
    assert abs(m) < 0.05, f"eps mean too far from 0: {m}"
    assert abs(s - 1.0) < 0.05, f"eps std too far from 1: {s}"
    # Distinct noise per sample (within a block and across blocks).
    assert float(np.abs(eps_hat[0] - eps_hat[1]).max()) > 0.1
    assert float(np.abs(eps_hat[0] - eps_hat[-1]).max()) > 0.1

    print("KERNEL_OK")
</pallas_src>

<mosaic_0001>
module attributes {stable_mosaic.version = 11 : i64} {
  func.func @_rsample_kernel(%arg0: i32, %arg1: memref<32x128xf32, #tpu.memory_space<vmem>>, %arg2: memref<32x128xf32, #tpu.memory_space<vmem>>, %arg3: memref<4x32x128xf32, #tpu.memory_space<vmem>>) attributes {dimension_semantics = [#tpu.dimension_semantics<parallel>], iteration_bounds = array<i64: 2>, scalar_prefetch = 0 : i64, scratch_operands = 0 : i64, tpu.core_type = #tpu.core_type<tc>, window_params = [{pipeline_mode = #tpu.pipeline_mode<synchronous>, transform_indices = @transform_0, window_bounds = array<i64: 32, 128>}, {pipeline_mode = #tpu.pipeline_mode<synchronous>, transform_indices = @transform_1, window_bounds = array<i64: 32, 128>}, {transform_indices = @transform_2, window_bounds = array<i64: 4, 32, 128>}]} {
    %c0 = arith.constant 0 : index
    %c0_0 = arith.constant 0 : index
    %0 = vector.load %arg1[%c0, %c0_0] : memref<32x128xf32, #tpu.memory_space<vmem>>, vector<32x128xf32>
    %c0_1 = arith.constant 0 : index
    %c0_2 = arith.constant 0 : index
    %1 = vector.load %arg2[%c0_1, %c0_2] : memref<32x128xf32, #tpu.memory_space<vmem>>, vector<32x128xf32>
    %cst = arith.constant 0.000000e+00 : f32
    %2 = vector.broadcast %cst : f32 to vector<32x128xf32>
    %3 = arith.maximumf %1, %2 : vector<32x128xf32>
    %4 = math.absf %1 : vector<32x128xf32>
    %cst_3 = arith.constant 0.000000e+00 : f32
    %5 = vector.broadcast %cst_3 : f32 to vector<32x128xf32>
    %6 = arith.subf %5, %4 : vector<32x128xf32>
    %7 = math.exp %6 : vector<32x128xf32>
    %cst_4 = arith.constant 1.000000e+00 : f32
    %8 = vector.broadcast %cst_4 : f32 to vector<32x128xf32>
    %9 = arith.addf %8, %7 : vector<32x128xf32>
    %10 = math.log %9 : vector<32x128xf32>
    %11 = arith.addf %3, %10 : vector<32x128xf32>
    %12 = tpu.iota {dimensions = array<i32: 0>} : vector<32x128xi32>
    %13 = tpu.iota {dimensions = array<i32: 1>} : vector<32x128xi32>
    %c0_i32 = arith.constant 0 : i32
    %14 = vector.broadcast %c0_i32 : i32 to vector<32x128xi32>
    %15 = arith.addi %12, %14 : vector<32x128xi32>
    %c128_i32 = arith.constant 128 : i32
    %16 = vector.broadcast %c128_i32 : i32 to vector<32x128xi32>
    %17 = arith.muli %15, %16 : vector<32x128xi32>
    %18 = arith.addi %17, %13 : vector<32x128xi32>
    %c4_i32 = arith.constant 4 : i32
    %19 = arith.muli %arg0, %c4_i32 : i32
    %c0_i32_5 = arith.constant 0 : i32
    %c4_i32_6 = arith.constant 4 : i32
    %20 = arith.addi %c0_i32_5, %c4_i32_6 : i32
    %c1_i32 = arith.constant 1 : i32
    scf.for %arg4 = %c0_i32_5 to %20 step %c1_i32  : i32 {
      %21 = arith.addi %19, %arg4 : i32
      %c4096_i32 = arith.constant 4096 : i32
      %22 = arith.muli %21, %c4096_i32 : i32
      %23 = vector.broadcast %22 : i32 to vector<32x128xi32>
      %24 = arith.addi %18, %23 : vector<32x128xi32>
      %c388445122_i32 = arith.constant 388445122 : i32
      %25 = vector.broadcast %c388445122_i32 : i32 to vector<32x128xi32>
      %26 = arith.xori %24, %25 : vector<32x128xi32>
      %c16_i32 = arith.constant 16 : i32
      %27 = vector.broadcast %c16_i32 : i32 to vector<32x128xi32>
      %28 = arith.shrsi %26, %27 : vector<32x128xi32>
      %c65535_i32 = arith.constant 65535 : i32
      %29 = vector.broadcast %c65535_i32 : i32 to vector<32x128xi32>
      %30 = arith.andi %28, %29 : vector<32x128xi32>
      %31 = arith.xori %26, %30 : vector<32x128xi32>
      %c2146121005_i32 = arith.constant 2146121005 : i32
      %32 = vector.broadcast %c2146121005_i32 : i32 to vector<32x128xi32>
      %33 = arith.muli %31, %32 : vector<32x128xi32>
      %c15_i32 = arith.constant 15 : i32
      %34 = vector.broadcast %c15_i32 : i32 to vector<32x128xi32>
      %35 = arith.shrsi %33, %34 : vector<32x128xi32>
      %c131071_i32 = arith.constant 131071 : i32
      %36 = vector.broadcast %c131071_i32 : i32 to vector<32x128xi32>
      %37 = arith.andi %35, %36 : vector<32x128xi32>
      %38 = arith.xori %33, %37 : vector<32x128xi32>
      %c-2073254261_i32 = arith.constant -2073254261 : i32
      %39 = vector.broadcast %c-2073254261_i32 : i32 to vector<32x128xi32>
      %40 = arith.muli %38, %39 : vector<32x128xi32>
      %c16_i32_8 = arith.constant 16 : i32
      %41 = vector.broadcast %c16_i32_8 : i32 to vector<32x128xi32>
      %42 = arith.shrsi %40, %41 : vector<32x128xi32>
      %c65535_i32_9 = arith.constant 65535 : i32
      %43 = vector.broadcast %c65535_i32_9 : i32 to vector<32x128xi32>
      %44 = arith.andi %42, %43 : vector<32x128xi32>
      %45 = arith.xori %40, %44 : vector<32x128xi32>
      %c9_i32 = arith.constant 9 : i32
      %46 = vector.broadcast %c9_i32 : i32 to vector<32x128xi32>
      %47 = arith.shrsi %45, %46 : vector<32x128xi32>
      %c8388607_i32 = arith.constant 8388607 : i32
      %48 = vector.broadcast %c8388607_i32 : i32 to vector<32x128xi32>
      %49 = arith.andi %47, %48 : vector<32x128xi32>
      %50 = arith.sitofp %49 : vector<32x128xi32> to vector<32x128xf32>
      %cst_10 = arith.constant 5.000000e-01 : f32
      %51 = vector.broadcast %cst_10 : f32 to vector<32x128xf32>
      %52 = arith.addf %50, %51 : vector<32x128xf32>
      %cst_11 = arith.constant 1.1920929E-7 : f32
      %53 = vector.broadcast %cst_11 : f32 to vector<32x128xf32>
      %54 = arith.mulf %52, %53 : vector<32x128xf32>
      %cst_12 = arith.constant 5.000000e-01 : f32
      %55 = vector.broadcast %cst_12 : f32 to vector<32x128xf32>
      %56 = arith.subf %54, %55 : vector<32x128xf32>
      %57 = arith.mulf %56, %56 : vector<32x128xf32>
      %cst_13 = arith.constant -39.6968307 : f32
      %58 = vector.broadcast %cst_13 : f32 to vector<32x128xf32>
      %59 = arith.mulf %58, %57 : vector<32x128xf32>
      %cst_14 = arith.constant 220.946106 : f32
      %60 = vector.broadcast %cst_14 : f32 to vector<32x128xf32>
      %61 = arith.addf %59, %60 : vector<32x128xf32>
      %62 = arith.mulf %61, %57 : vector<32x128xf32>
      %cst_15 = arith.constant -275.928497 : f32
      %63 = vector.broadcast %cst_15 : f32 to vector<32x128xf32>
      %64 = arith.addf %62, %63 : vector<32x128xf32>
      %65 = arith.mulf %64, %57 : vector<32x128xf32>
      %cst_16 = arith.constant 138.357758 : f32
      %66 = vector.broadcast %cst_16 : f32 to vector<32x128xf32>
      %67 = arith.addf %65, %66 : vector<32x128xf32>
      %68 = arith.mulf %67, %57 : vector<32x128xf32>
      %cst_17 = arith.constant -30.6647987 : f32
      %69 = vector.broadcast %cst_17 : f32 to vector<32x128xf32>
      %70 = arith.addf %68, %69 : vector<32x128xf32>
      %71 = arith.mulf %70, %57 : vector<32x128xf32>
      %cst_18 = arith.constant 2.50662827 : f32
      %72 = vector.broadcast %cst_18 : f32 to vector<32x128xf32>
      %73 = arith.addf %71, %72 : vector<32x128xf32>
      %74 = arith.mulf %73, %56 : vector<32x128xf32>
      %cst_19 = arith.constant -54.4760971 : f32
      %75 = vector.broadcast %cst_19 : f32 to vector<32x128xf32>
      %76 = arith.mulf %75, %57 : vector<32x128xf32>
      %cst_20 = arith.constant 161.585831 : f32
      %77 = vector.broadcast %cst_20 : f32 to vector<32x128xf32>
      %78 = arith.addf %76, %77 : vector<32x128xf32>
      %79 = arith.mulf %78, %57 : vector<32x128xf32>
      %cst_21 = arith.constant -155.698975 : f32
      %80 = vector.broadcast %cst_21 : f32 to vector<32x128xf32>
      %81 = arith.addf %79, %80 : vector<32x128xf32>
      %82 = arith.mulf %81, %57 : vector<32x128xf32>
      %cst_22 = arith.constant 66.8013153 : f32
      %83 = vector.broadcast %cst_22 : f32 to vector<32x128xf32>
      %84 = arith.addf %82, %83 : vector<32x128xf32>
      %85 = arith.mulf %84, %57 : vector<32x128xf32>
      %cst_23 = arith.constant -13.2806816 : f32
      %86 = vector.broadcast %cst_23 : f32 to vector<32x128xf32>
      %87 = arith.addf %85, %86 : vector<32x128xf32>
      %88 = arith.mulf %87, %57 : vector<32x128xf32>
      %cst_24 = arith.constant 1.000000e+00 : f32
      %89 = vector.broadcast %cst_24 : f32 to vector<32x128xf32>
      %90 = arith.addf %88, %89 : vector<32x128xf32>
      %91 = arith.divf %74, %90 : vector<32x128xf32>
      %92 = math.log %54 : vector<32x128xf32>
      %cst_25 = arith.constant -2.000000e+00 : f32
      %93 = vector.broadcast %cst_25 : f32 to vector<32x128xf32>
      %94 = arith.mulf %93, %92 : vector<32x128xf32>
      %95 = math.sqrt %94 : vector<32x128xf32>
      %cst_26 = arith.constant -0.0077848942 : f32
      %96 = vector.broadcast %cst_26 : f32 to vector<32x128xf32>
      %97 = arith.mulf %96, %95 : vector<32x128xf32>
      %cst_27 = arith.constant -0.322396457 : f32
      %98 = vector.broadcast %cst_27 : f32 to vector<32x128xf32>
      %99 = arith.addf %97, %98 : vector<32x128xf32>
      %100 = arith.mulf %99, %95 : vector<32x128xf32>
      %cst_28 = arith.constant -2.40075827 : f32
      %101 = vector.broadcast %cst_28 : f32 to vector<32x128xf32>
      %102 = arith.addf %100, %101 : vector<32x128xf32>
      %103 = arith.mulf %102, %95 : vector<32x128xf32>
      %cst_29 = arith.constant -2.54973245 : f32
      %104 = vector.broadcast %cst_29 : f32 to vector<32x128xf32>
      %105 = arith.addf %103, %104 : vector<32x128xf32>
      %106 = arith.mulf %105, %95 : vector<32x128xf32>
      %cst_30 = arith.constant 4.37466431 : f32
      %107 = vector.broadcast %cst_30 : f32 to vector<32x128xf32>
      %108 = arith.addf %106, %107 : vector<32x128xf32>
      %109 = arith.mulf %108, %95 : vector<32x128xf32>
      %cst_31 = arith.constant 2.938164 : f32
      %110 = vector.broadcast %cst_31 : f32 to vector<32x128xf32>
      %111 = arith.addf %109, %110 : vector<32x128xf32>
      %cst_32 = arith.constant 0.00778469583 : f32
      %112 = vector.broadcast %cst_32 : f32 to vector<32x128xf32>
      %113 = arith.mulf %112, %95 : vector<32x128xf32>
      %cst_33 = arith.constant 0.322467119 : f32
      %114 = vector.broadcast %cst_33 : f32 to vector<32x128xf32>
      %115 = arith.addf %113, %114 : vector<32x128xf32>
      %116 = arith.mulf %115, %95 : vector<32x128xf32>
      %cst_34 = arith.constant 2.44513416 : f32
      %117 = vector.broadcast %cst_34 : f32 to vector<32x128xf32>
      %118 = arith.addf %116, %117 : vector<32x128xf32>
      %119 = arith.mulf %118, %95 : vector<32x128xf32>
      %cst_35 = arith.constant 3.7544086 : f32
      %120 = vector.broadcast %cst_35 : f32 to vector<32x128xf32>
      %121 = arith.addf %119, %120 : vector<32x128xf32>
      %122 = arith.mulf %121, %95 : vector<32x128xf32>
      %cst_36 = arith.constant 1.000000e+00 : f32
      %123 = vector.broadcast %cst_36 : f32 to vector<32x128xf32>
      %124 = arith.addf %122, %123 : vector<32x128xf32>
      %125 = arith.divf %111, %124 : vector<32x128xf32>
      %cst_37 = arith.constant 1.000000e+00 : f32
      %126 = vector.broadcast %cst_37 : f32 to vector<32x128xf32>
      %127 = arith.subf %126, %54 : vector<32x128xf32>
      %128 = math.log %127 : vector<32x128xf32>
      %cst_38 = arith.constant -2.000000e+00 : f32
      %129 = vector.broadcast %cst_38 : f32 to vector<32x128xf32>
      %130 = arith.mulf %129, %128 : vector<32x128xf32>
      %131 = math.sqrt %130 : vector<32x128xf32>
      %cst_39 = arith.constant -0.0077848942 : f32
      %132 = vector.broadcast %cst_39 : f32 to vector<32x128xf32>
      %133 = arith.mulf %132, %131 : vector<32x128xf32>
      %cst_40 = arith.constant -0.322396457 : f32
      %134 = vector.broadcast %cst_40 : f32 to vector<32x128xf32>
      %135 = arith.addf %133, %134 : vector<32x128xf32>
      %136 = arith.mulf %135, %131 : vector<32x128xf32>
      %cst_41 = arith.constant -2.40075827 : f32
      %137 = vector.broadcast %cst_41 : f32 to vector<32x128xf32>
      %138 = arith.addf %136, %137 : vector<32x128xf32>
      %139 = arith.mulf %138, %131 : vector<32x128xf32>
      %cst_42 = arith.constant -2.54973245 : f32
      %140 = vector.broadcast %cst_42 : f32 to vector<32x128xf32>
      %141 = arith.addf %139, %140 : vector<32x128xf32>
      %142 = arith.mulf %141, %131 : vector<32x128xf32>
      %cst_43 = arith.constant 4.37466431 : f32
      %143 = vector.broadcast %cst_43 : f32 to vector<32x128xf32>
      %144 = arith.addf %142, %143 : vector<32x128xf32>
      %145 = arith.mulf %144, %131 : vector<32x128xf32>
      %cst_44 = arith.constant 2.938164 : f32
      %146 = vector.broadcast %cst_44 : f32 to vector<32x128xf32>
      %147 = arith.addf %145, %146 : vector<32x128xf32>
      %cst_45 = arith.constant 0.000000e+00 : f32
      %148 = vector.broadcast %cst_45 : f32 to vector<32x128xf32>
      %149 = arith.subf %148, %147 : vector<32x128xf32>
      %cst_46 = arith.constant 0.00778469583 : f32
      %150 = vector.broadcast %cst_46 : f32 to vector<32x128xf32>
      %151 = arith.mulf %150, %131 : vector<32x128xf32>
      %cst_47 = arith.constant 0.322467119 : f32
      %152 = vector.broadcast %cst_47 : f32 to vector<32x128xf32>
      %153 = arith.addf %151, %152 : vector<32x128xf32>
      %154 = arith.mulf %153, %131 : vector<32x128xf32>
      %cst_48 = arith.constant 2.44513416 : f32
      %155 = vector.broadcast %cst_48 : f32 to vector<32x128xf32>
      %156 = arith.addf %154, %155 : vector<32x128xf32>
      %157 = arith.mulf %156, %131 : vector<32x128xf32>
      %cst_49 = arith.constant 3.7544086 : f32
      %158 = vector.broadcast %cst_49 : f32 to vector<32x128xf32>
      %159 = arith.addf %157, %158 : vector<32x128xf32>
      %160 = arith.mulf %159, %131 : vector<32x128xf32>
      %cst_50 = arith.constant 1.000000e+00 : f32
      %161 = vector.broadcast %cst_50 : f32 to vector<32x128xf32>
      %162 = arith.addf %160, %161 : vector<32x128xf32>
      %163 = arith.divf %149, %162 : vector<32x128xf32>
      %cst_51 = arith.constant 2.425000e-02 : f32
      %164 = vector.broadcast %cst_51 : f32 to vector<32x128xf32>
      %165 = arith.cmpf olt, %54, %164 : vector<32x128xf32>
      %cst_52 = arith.constant 2.425000e-02 : f32
      %166 = vector.broadcast %cst_52 : f32 to vector<32x128xf32>
      %167 = arith.cmpf olt, %127, %166 : vector<32x128xf32>
      %168 = arith.select %167, %163, %91 : vector<32x128xi1>, vector<32x128xf32>
      %169 = arith.select %165, %125, %168 : vector<32x128xi1>, vector<32x128xf32>
      %170 = arith.mulf %11, %169 : vector<32x128xf32>
      %171 = arith.addf %0, %170 : vector<32x128xf32>
      %172 = arith.index_cast %arg4 : i32 to index
      %c0_53 = arith.constant 0 : index
      %c0_54 = arith.constant 0 : index
      %173 = vector.load %arg3[%172, %c0_53, %c0_54] : memref<4x32x128xf32, #tpu.memory_space<vmem>>, vector<1x32x128xf32>
      %174 = vector.shape_cast %173 : vector<1x32x128xf32> to vector<32x128xf32>
      %175 = vector.shape_cast %171 : vector<32x128xf32> to vector<1x32x128xf32>
      tpu.vector_store %arg3[%172, %c0_53, %c0_54], %175 {strides = array<i32>} : memref<4x32x128xf32, #tpu.memory_space<vmem>>, vector<1x32x128xf32>,
    }
    %c4_i32_7 = arith.constant 4 : i32
    return
  }
  func.func @transform_0(%arg0: i32) -> (i32, i32) {
    %c0_i32 = arith.constant 0 : i32
    %c0_i32_0 = arith.constant 0 : i32
    %c0_i32_1 = arith.constant 0 : i32
    return %c0_i32, %c0_i32_0 : i32, i32
  }
  func.func @transform_1(%arg0: i32) -> (i32, i32) {
    %c0_i32 = arith.constant 0 : i32
    %c0_i32_0 = arith.constant 0 : i32
    %c0_i32_1 = arith.constant 0 : i32
    return %c0_i32, %c0_i32_0 : i32, i32
  }
  func.func @transform_2(%arg0: i32) -> (i32, i32, i32) {
    %c0_i32 = arith.constant 0 : i32
    %c0_i32_0 = arith.constant 0 : i32
    %c0_i32_1 = arith.constant 0 : i32
    return %arg0, %c0_i32, %c0_i32_0 : i32, i32, i32
  }
}

</mosaic_0001>

<llo_original>
// kernel: tpu_custom_call.1
$region0: #{tpu_custom_call.1}
  #allocation0 [shape = 'u32[]', space=smem, size = 0x4, offset = 0x4, fixed_abs, tag = 'smem constant byte address 0x4 - core index']
  #allocation1 [shape = 'u32[72,128]{1,0:T(1,128)}', space=vmem, size = 0x9000, scoped, tag = 'internal scratch']
  %s0 = inlined_call_operand.hbm [shape: f32[32,128], index: 0, kind: input, shape index: {}]
  %s1 = inlined_call_operand.hbm [shape: f32[32,128], index: 1, kind: input, shape index: {}]
  %s2 = inlined_call_operand.hbm [shape: f32[8,32,128], index: 2, kind: output, shape index: {}]
  %s3 = sld [smem:[#allocation0]]
  $region56: #{tpu_custom_call.1} parent=0
    _
  %s5 = ssub.s32 1, %s3
  %s6 = scalar_select 0, %s5, %s3
  $region1: #{tpu_custom_call.1} parent=0
    #allocation2 [shape = 'u8[16384]{0}', space=vmem, size = 0x4000, scoped, tag = 'input window, operand 0, single buffered']
    #allocation3 [shape = 's32[2]{0}', space=sflag, size = 0x8, scoped, tag = 'scoped memory for tpu_custom_call.1']
    #allocation4 [shape = 's32[2]{0}', space=sflag, size = 0x8, scoped, tag = 'scoped memory for tpu_custom_call.1']
    #allocation5 [shape = 'u8[16384]{0}', space=vmem, size = 0x4000, scoped, tag = 'input window, operand 1, single buffered']
    #allocation6 [shape = 's32[1]{0}', space=sflag, size = 0x4, scoped, tag = 'scoped memory for tpu_custom_call.1']
    #allocation7 [shape = 'u8[131072]{0}', space=vmem, size = 0x20000, scoped, tag = 'output window, operand 0']
    %7 = vsyncpa [#allocation3], 0
    %8 = vsyncpa [#allocation6], 0
    %9 = vsyncpa [#allocation4], 0
    %s10 = scalar_lea.sflag [#allocation4], 1
    %11 = vsyncpa %s10, 0
    loop: start=0, step=1, limit=4
    $region2: #{tpu_custom_call.1} parent=1 // loop_pre_header
      _
    $region3: #{tpu_custom_call.1} parent=1 // loop_header
      %s13 = sphi 0, %s17
      %p14 = scmp.ge.s32.totalorder %s13, 4
      %s21 = sphi 0, %s21
      %s23 = sphi 0, %s21
      %s24 = sphi 0, %s23
      %s38 = sphi 0, %s24
      %s42 = sphi 0, %s42
      %s44 = sphi 0, %s42
      %s45 = sphi 0, %s44
      %s59 = sphi 0, %s45
      %s65 = sphi 0, %s67
      %s68 = sphi 0, %s65
      %s69 = sphi 0, %s68
      %s85 = sphi 0, %s69
    $region4: #{tpu_custom_call.1} parent=1 // loop_header_branch
      %16 = sbr.rel (%p14) target = $region8
    $region5: #{tpu_custom_call.1} parent=1 // loop_body
      %s18 = ssub.s32 %s13, 1
      %s19 = ssub.s32 %s13, 2
      %s20 = sadd.s32 %s13, 1
      %s22 = sadd.s32 %s21, 1
      %p25 = scmp.eq.s32.totalorder %s13, 1
      %p26 = scmp.ne.s32.totalorder %s21, %s23
      %p27 = scmp.eq.s32.totalorder %s13, 0
      %p28 = por %p26, %p27
      %p29 = scmp.ne.s32.totalorder %s21, %s23
      %p30 = scmp.eq.s32.totalorder %s18, 1
      %p31 = por %p29, %p30
      %p32 = scmp.ne.s32.totalorder %s23, %s24
      %p33 = scmp.eq.s32.totalorder %s18, 0
      %p34 = por %p32, %p33
      %p35 = scmp.ne.s32.totalorder %s23, %s24
      %p36 = scmp.eq.s32.totalorder %s19, 1
      %p37 = por %p35, %p36
      %p39 = scmp.ne.s32.totalorder %s24, %s38
      %p40 = scmp.eq.s32.totalorder %s19, 0
      %p41 = por %p39, %p40
      %s43 = sadd.s32 %s42, 1
      %p46 = scmp.eq.s32.totalorder %s13, 1
      %p47 = scmp.ne.s32.totalorder %s42, %s44
      %p48 = scmp.eq.s32.totalorder %s13, 0
      %p49 = por %p47, %p48
      %p50 = scmp.ne.s32.totalorder %s42, %s44
      %p51 = scmp.eq.s32.totalorder %s18, 1
      %p52 = por %p50, %p51
      %p53 = scmp.ne.s32.totalorder %s44, %s45
      %p54 = scmp.eq.s32.totalorder %s18, 0
      %p55 = por %p53, %p54
      %p56 = scmp.ne.s32.totalorder %s44, %s45
      %p57 = scmp.eq.s32.totalorder %s19, 1
      %p58 = por %p56, %p57
      %p60 = scmp.ne.s32.totalorder %s45, %s59
      %p61 = scmp.eq.s32.totalorder %s19, 0
      %p62 = por %p60, %p61
      %s63 = ssub.s32 %s13, %s20
      %p64 = scmp.eq.s32.totalorder %s63, 0
      %s66 = sadd.s32 %s65, 1
      %s67 = scalar_select %p64, %s65, %s66
      %p70 = pneg %p64
      %p71 = scmp.eq.s32.totalorder %s13, 1
      %p72 = por %p70, %p71
      %p73 = scmp.ne.s32.totalorder %s65, %s68
      %p74 = scmp.eq.s32.totalorder %s13, 0
      %p75 = por %p73, %p74
      %p76 = scmp.ne.s32.totalorder %s65, %s68
      %p77 = scmp.eq.s32.totalorder %s18, 1
      %p78 = por %p76, %p77
      %p79 = scmp.ne.s32.totalorder %s68, %s69
      %p80 = scmp.eq.s32.totalorder %s18, 0
      %p81 = por %p79, %p80
      %p82 = scmp.ne.s32.totalorder %s68, %s69
      %p83 = scmp.eq.s32.totalorder %s19, 1
      %p84 = por %p82, %p83
      %p86 = scmp.ne.s32.totalorder %s69, %s85
      %p87 = scmp.eq.s32.totalorder %s19, 0
      %p88 = por %p86, %p87
      %p89 = scmp.le.s32.totalorder 1, %s13
      %p90 = scmp.lt.s32.totalorder %s13, 3
      %p91 = pnand %p89, %p90
      %p92 = pneg %p91
      // Predicated region
      $region9: #{tpu_custom_call.1} parent=5 // pred_check
        _
      $region10: #{tpu_custom_call.1} parent=5 // pred_check_branch
        %94 = sbr.rel (%p91) target = $region12
      $region11: #{tpu_custom_call.1} parent=5 // pred_region
        %s95 = ssub.s32 %s13, 1
        // Predicated region
        $region13: #{tpu_custom_call.1} parent=11 // pred_check
          %p96 = pneg %p34
        $region14: #{tpu_custom_call.1} parent=11 // pred_check_branch
          %98 = sbr.rel (%p96) target = $region16
        $region15: #{tpu_custom_call.1} parent=11 // pred_region
          %100 = vsyncadd [#allocation3], 0
          %s101 = sshll.u32 %s0, 4
          %s102 = int_to_ptr.hbm [resolvable:$true] %s101
          %s103 = sshll.u32 [#allocation2], 4
          %s104 = int_to_ptr.vmem [resolvable:$true] %s103
          %109 = dma.hbm_to_vmem [thread:$0]  %s102, 512, %s104, [#allocation3], 128, 128, 8
        $region16: #{tpu_custom_call.1} parent=11 // pred_fallthru
          _
        // Predicated region
        $region17: #{tpu_custom_call.1} parent=11 // pred_check
          %p110 = pneg %p55
        $region18: #{tpu_custom_call.1} parent=11 // pred_check_branch
          %112 = sbr.rel (%p110) target = $region20
        $region19: #{tpu_custom_call.1} parent=11 // pred_region
          %114 = vsyncadd [#allocation6], 0
          %s115 = sshll.u32 %s1, 4
          %s116 = int_to_ptr.hbm [resolvable:$true] %s115
          %s117 = sshll.u32 [#allocation5], 4
          %s118 = int_to_ptr.vmem [resolvable:$true] %s117
          %123 = dma.hbm_to_vmem [thread:$0]  %s116, 512, %s118, [#allocation6], 128, 128, 8
        $region20: #{tpu_custom_call.1} parent=11 // pred_fallthru
          _
      $region12: #{tpu_custom_call.1} parent=5 // pred_fallthru
        _
      %p124 = scmp.lt.s32.totalorder %s13, 2
      // Predicated region
      $region21: #{tpu_custom_call.1} parent=5 // pred_check
        %p125 = pneg %p124
      $region22: #{tpu_custom_call.1} parent=5 // pred_check_branch
        %127 = sbr.rel (%p125) target = $region24
      $region23: #{tpu_custom_call.1} parent=5 // pred_region
        _
      $region24: #{tpu_custom_call.1} parent=5 // pred_fallthru
        _
      %p128 = scmp.le.s32.totalorder 1, %s13
      %p129 = scmp.lt.s32.totalorder %s13, 3
      %p130 = pnand %p128, %p129
      %p131 = pneg %p130
      // Predicated region
      $region25: #{tpu_custom_call.1} parent=5 // pred_check
        _
      $region26: #{tpu_custom_call.1} parent=5 // pred_check_branch
        %133 = sbr.rel (%p130) target = $region28
      $region27: #{tpu_custom_call.1} parent=5 // pred_region
        %s134 = ssub.s32 %s13, 1
        // Predicated region
        $region29: #{tpu_custom_call.1} parent=27 // pred_check
          %p135 = pneg %p34
        $region30: #{tpu_custom_call.1} parent=27 // pred_check_branch
          %137 = sbr.rel (%p135) target = $region32
        $region31: #{tpu_custom_call.1} parent=27 // pred_region
          %139 = dma.done [#allocation3], 512
        $region32: #{tpu_custom_call.1} parent=27 // pred_fallthru
          _
        // Predicated region
        $region33: #{tpu_custom_call.1} parent=27 // pred_check
          %p140 = pneg %p55
        $region34: #{tpu_custom_call.1} parent=27 // pred_check_branch
          %142 = sbr.rel (%p140) target = $region36
        $region35: #{tpu_custom_call.1} parent=27 // pred_region
          %144 = dma.done [#allocation6], 512
        $region36: #{tpu_custom_call.1} parent=27 // pred_fallthru
          _
        %p145 = pneg %p34
        %p146 = pneg %p31
        %p147 = pneg %p55
        %p148 = pneg %p52
        %p149 = pneg %p81
        %p150 = pneg %p78
        %s151 = sand.u32 %s68, 1
        %s152 = scalar_lea.sflag [#allocation4], %s151
        %s153 = sand.u32 %s68, 1
        %s154 = smul.addr %s153, 128
        %s155 = scalar_lea.vmem [#allocation7], %s154
        %s156 = smul.u32 4, %s18
        %v157 = vld [vmem:[#allocation2] sm:$0xff]
        %v158 = vld [vmem:[#allocation2 + $0x8] sm:$0xff]
        %v159 = vld [vmem:[#allocation2 + $0x10] sm:$0xff]
        %v160 = vld [vmem:[#allocation2 + $0x18] sm:$0xff]
        %v161 = vld [vmem:[#allocation5] sm:$0xff]
        %v162 = vld [vmem:[#allocation5 + $0x8] sm:$0xff]
        %v163 = vld [vmem:[#allocation5 + $0x10] sm:$0xff]
        %v164 = vld [vmem:[#allocation5 + $0x18] sm:$0xff]
        %v165 = vmax.f32 %v161, 0.0
        %v166 = vmax.f32 %v162, 0.0
        %v167 = vmax.f32 %v163, 0.0
        %v168 = vmax.f32 %v164, 0.0
        %v169 = vand.u32 2147483647, %v161
        %v170 = vand.u32 2147483647, %v162
        %v171 = vand.u32 2147483647, %v163
        %v172 = vand.u32 2147483647, %v164
        %v173 = vsub.f32 0.0, %v169
        %v174 = vsub.f32 0.0, %v170
        %v175 = vsub.f32 0.0, %v171
        %v176 = vsub.f32 0.0, %v172
        %v177 = vmul.f32 %v173, 1.442695
        %v178 = vpow.pop %v177
        %v179 = vmul.f32 %v174, 1.442695
        %v180 = vpow.pop %v179
        %v181 = vmul.f32 %v175, 1.442695
        %v182 = vpow.pop %v181
        %v183 = vmul.f32 %v176, 1.442695
        %v184 = vpow.pop %v183
        %v185 = vadd.f32 %v178, 1.0
        %v186 = vadd.f32 %v180, 1.0
        %v187 = vadd.f32 %v182, 1.0
        %v188 = vadd.f32 %v184, 1.0
        %v189 = vlog2.pop %v185
        %v190 = vmul.f32 %v189, 0.6931472
        %v191 = vlog2.pop %v186
        %v192 = vmul.f32 %v191, 0.6931472
        %v193 = vlog2.pop %v187
        %v194 = vmul.f32 %v193, 0.6931472
        %v195 = vlog2.pop %v188
        %v196 = vmul.f32 %v195, 0.6931472
        %v197 = vadd.f32 %v165, %v190
        %v198 = vadd.f32 %v166, %v192
        %v199 = vadd.f32 %v167, %v194
        %v200 = vadd.f32 %v168, %v196
        %v201 = vlaneseq
        %v202 = vshrl.u32 %v201, 7
        %v203 = vadd.s32 %v202, 8
        %v204 = vadd.s32 %v202, 16
        %v205 = vadd.s32 %v202, 24
        %v206 = vlaneseq
        %v207 = vand.u32 %v206, 127
        %v208 = vmul.u32 %v202, 128
        %v209 = vmul.u32 %v203, 128
        %v210 = vmul.u32 %v204, 128
        %v211 = vmul.u32 %v205, 128
        %v212 = vadd.s32 %v208, %v207
        %v213 = vadd.s32 %v209, %v207
        %v214 = vadd.s32 %v210, %v207
        %v215 = vadd.s32 %v211, %v207
        %s216 = smul.u32 %s18, 4
        loop: start=0, step=1, limit=4
        $region37: #{tpu_custom_call.1} parent=27 // loop_pre_header
          _
        $region38: #{tpu_custom_call.1} parent=27 // loop_header
          %s218 = sphi 0, %s222
          %p219 = scmp.ge.s32.totalorder %s218, 4
        $region39: #{tpu_custom_call.1} parent=27 // loop_header_branch
          %221 = sbr.rel (%p219) target = $region43
        $region40: #{tpu_custom_call.1} parent=27 // loop_body
          %s223 = sadd.s32 %s216, %s218
          %s224 = smul.u32 %s223, 4096
          %v225 = vstv %s224
          %v226 = vadd.s32 %v212, %v225
          %v227 = vadd.s32 %v213, %v225
          %v228 = vadd.s32 %v214, %v225
          %v229 = vadd.s32 %v215, %v225
          %v230 = vxor.u32 %v226, 388445122
          %v231 = vxor.u32 %v227, 388445122
          %v232 = vxor.u32 %v228, 388445122
          %v233 = vxor.u32 %v229, 388445122
          %v234 = vshra.s32 %v230, 16
          %v235 = vshra.s32 %v231, 16
          %v236 = vshra.s32 %v232, 16
          %v237 = vshra.s32 %v233, 16
          %v238 = vand.u32 %v234, 65535
          %v239 = vand.u32 %v235, 65535
          %v240 = vand.u32 %v236, 65535
          %v241 = vand.u32 %v237, 65535
          %v242 = vxor.u32 %v230, %v238
          %v243 = vxor.u32 %v231, %v239
          %v244 = vxor.u32 %v232, %v240
          %v245 = vxor.u32 %v233, %v241
          %v246 = vmul.u32 %v242, 2146121005
          %v247 = vmul.u32 %v243, 2146121005
          %v248 = vmul.u32 %v244, 2146121005
          %v249 = vmul.u32 %v245, 2146121005
          %v250 = vshra.s32 %v246, 15
          %v251 = vshra.s32 %v247, 15
          %v252 = vshra.s32 %v248, 15
          %v253 = vshra.s32 %v249, 15
          %v254 = vand.u32 %v250, 131071
          %v255 = vand.u32 %v251, 131071
          %v256 = vand.u32 %v252, 131071
          %v257 = vand.u32 %v253, 131071
          %v258 = vxor.u32 %v246, %v254
          %v259 = vxor.u32 %v247, %v255
          %v260 = vxor.u32 %v248, %v256
          %v261 = vxor.u32 %v249, %v257
          %v262 = vmul.u32 %v258, 2221713035
          %v263 = vmul.u32 %v259, 2221713035
          %v264 = vmul.u32 %v260, 2221713035
          %v265 = vmul.u32 %v261, 2221713035
          %v266 = vshra.s32 %v262, 16
          %v267 = vshra.s32 %v263, 16
          %v268 = vshra.s32 %v264, 16
          %v269 = vshra.s32 %v265, 16
          %v270 = vand.u32 %v266, 65535
          %v271 = vand.u32 %v267, 65535
          %v272 = vand.u32 %v268, 65535
          %v273 = vand.u32 %v269, 65535
          %v274 = vxor.u32 %v262, %v270
          %v275 = vxor.u32 %v263, %v271
          %v276 = vxor.u32 %v264, %v272
          %v277 = vxor.u32 %v265, %v273
          %v278 = vshra.s32 %v274, 9
          %v279 = vshra.s32 %v275, 9
          %v280 = vshra.s32 %v276, 9
          %v281 = vshra.s32 %v277, 9
          %v282 = vand.u32 %v278, 8388607
          %v283 = vand.u32 %v279, 8388607
          %v284 = vand.u32 %v280, 8388607
          %v285 = vand.u32 %v281, 8388607
          %v286 = vcvt.s32.f32 %v282
          %v287 = vcvt.s32.f32 %v283
          %v288 = vcvt.s32.f32 %v284
          %v289 = vcvt.s32.f32 %v285
          %v290 = vadd.f32 %v286, 0.5
          %v291 = vadd.f32 %v287, 0.5
          %v292 = vadd.f32 %v288, 0.5
          %v293 = vadd.f32 %v289, 0.5
          %v294 = vmul.f32 %v290, 1.1920929e-07
          %v295 = vmul.f32 %v291, 1.1920929e-07
          %v296 = vmul.f32 %v292, 1.1920929e-07
          %v297 = vmul.f32 %v293, 1.1920929e-07
          %v298 = vsub.f32 %v294, 0.5
          %v299 = vsub.f32 %v295, 0.5
          %v300 = vsub.f32 %v296, 0.5
          %v301 = vsub.f32 %v297, 0.5
          %v302 = vmul.f32 %v298, %v298
          %v303 = vmul.f32 %v299, %v299
          %v304 = vmul.f32 %v300, %v300
          %v305 = vmul.f32 %v301, %v301
          %v306 = vmul.f32 %v302, -39.69683
          %v307 = vmul.f32 %v303, -39.69683
          %v308 = vmul.f32 %v304, -39.69683
          %v309 = vmul.f32 %v305, -39.69683
          %v310 = vadd.f32 %v306, 220.9461
          %v311 = vadd.f32 %v307, 220.9461
          %v312 = vadd.f32 %v308, 220.9461
          %v313 = vadd.f32 %v309, 220.9461
          %v314 = vmul.f32 %v310, %v302
          %v315 = vmul.f32 %v311, %v303
          %v316 = vmul.f32 %v312, %v304
          %v317 = vmul.f32 %v313, %v305
          %v318 = vadd.f32 %v314, -275.9285
          %v319 = vadd.f32 %v315, -275.9285
          %v320 = vadd.f32 %v316, -275.9285
          %v321 = vadd.f32 %v317, -275.9285
          %v322 = vmul.f32 %v318, %v302
          %v323 = vmul.f32 %v319, %v303
          %v324 = vmul.f32 %v320, %v304
          %v325 = vmul.f32 %v321, %v305
          %v326 = vadd.f32 %v322, 138.35776
          %v327 = vadd.f32 %v323, 138.35776
          %v328 = vadd.f32 %v324, 138.35776
          %v329 = vadd.f32 %v325, 138.35776
          %v330 = vmul.f32 %v326, %v302
          %v331 = vmul.f32 %v327, %v303
          %v332 = vmul.f32 %v328, %v304
          %v333 = vmul.f32 %v329, %v305
          %v334 = vadd.f32 %v330, -30.664799
          %v335 = vadd.f32 %v331, -30.664799
          %v336 = vadd.f32 %v332, -30.664799
          %v337 = vadd.f32 %v333, -30.664799
          %v338 = vmul.f32 %v334, %v302
          %v339 = vmul.f32 %v335, %v303
          %v340 = vmul.f32 %v336, %v304
          %v341 = vmul.f32 %v337, %v305
          %v342 = vadd.f32 %v338, 2.5066283
          %v343 = vadd.f32 %v339, 2.5066283
          %v344 = vadd.f32 %v340, 2.5066283
          %v345 = vadd.f32 %v341, 2.5066283
          %v346 = vmul.f32 %v342, %v298
          %v347 = vmul.f32 %v343, %v299
          %v348 = vmul.f32 %v344, %v300
          %v349 = vmul.f32 %v345, %v301
          %v350 = vmul.f32 %v302, -54.476097
          %v351 = vmul.f32 %v303, -54.476097
          %v352 = vmul.f32 %v304, -54.476097
          %v353 = vmul.f32 %v305, -54.476097
          %v354 = vadd.f32 %v350, 161.58583
          %v355 = vadd.f32 %v351, 161.58583
          %v356 = vadd.f32 %v352, 161.58583
          %v357 = vadd.f32 %v353, 161.58583
          %v358 = vmul.f32 %v354, %v302
          %v359 = vmul.f32 %v355, %v303
          %v360 = vmul.f32 %v356, %v304
          %v361 = vmul.f32 %v357, %v305
          %v362 = vadd.f32 %v358, -155.69897
          %v363 = vadd.f32 %v359, -155.69897
          %v364 = vadd.f32 %v360, -155.69897
          %v365 = vadd.f32 %v361, -155.69897
          %v366 = vmul.f32 %v362, %v302
          %v367 = vmul.f32 %v363, %v303
          %v368 = vmul.f32 %v364, %v304
          %v369 = vmul.f32 %v365, %v305
          %v370 = vadd.f32 %v366, 66.801315
          %v371 = vadd.f32 %v367, 66.801315
          %v372 = vadd.f32 %v368, 66.801315
          %v373 = vadd.f32 %v369, 66.801315
          %v374 = vmul.f32 %v370, %v302
          %v375 = vmul.f32 %v371, %v303
          %v376 = vmul.f32 %v372, %v304
          %v377 = vmul.f32 %v373, %v305
          %v378 = vadd.f32 %v374, -13.280682
          %v379 = vadd.f32 %v375, -13.280682
          %v380 = vadd.f32 %v376, -13.280682
          %v381 = vadd.f32 %v377, -13.280682
          %v382 = vmul.f32 %v378, %v302
          %v383 = vmul.f32 %v379, %v303
          %v384 = vmul.f32 %v380, %v304
          %v385 = vmul.f32 %v381, %v305
          %v386 = vadd.f32 %v382, 1.0
          %v387 = vadd.f32 %v383, 1.0
          %v388 = vadd.f32 %v384, 1.0
          %v389 = vadd.f32 %v385, 1.0
          %v390 = vrcp.pop %v386
          %v391 = vmul.f32 %v386, %v390
          %v392 = vsub.f32 1.0, %v391
          %v393 = vmul.f32 %v390, %v392
          %v394 = vadd.f32 %v390, %v393
          %vm395 = vweird.f32 %v386
          %vm396 = vweird.f32 %v390
          %vm397 = vmor %vm395, %vm396
          %v398 = vsel %vm397, %v390, %v394
          %v399 = vand.u32 2147483647, %v386
          %vm400 = vcmp.eq.f32.partialorder %v399, 8.507059e+37
          %v401 = vand.u32 %v386, 2147483648
          %v402 = vor.u32 1.1754944e-38, %v401
          %v403 = vsel %vm400, %v402, %v398
          %v404 = vmul.f32 %v346, %v403
          %v405 = vrcp.pop %v387
          %v406 = vmul.f32 %v387, %v405
          %v407 = vsub.f32 1.0, %v406
          %v408 = vmul.f32 %v405, %v407
          %v409 = vadd.f32 %v405, %v408
          %vm410 = vweird.f32 %v387
          %vm411 = vweird.f32 %v405
          %vm412 = vmor %vm410, %vm411
          %v413 = vsel %vm412, %v405, %v409
          %v414 = vand.u32 2147483647, %v387
          %vm415 = vcmp.eq.f32.partialorder %v414, 8.507059e+37
          %v416 = vand.u32 %v387, 2147483648
          %v417 = vor.u32 1.1754944e-38, %v416
          %v418 = vsel %vm415, %v417, %v413
          %v419 = vmul.f32 %v347, %v418
          %v420 = vrcp.pop %v388
          %v421 = vmul.f32 %v388, %v420
          %v422 = vsub.f32 1.0, %v421
          %v423 = vmul.f32 %v420, %v422
          %v424 = vadd.f32 %v420, %v423
          %vm425 = vweird.f32 %v388
          %vm426 = vweird.f32 %v420
          %vm427 = vmor %vm425, %vm426
          %v428 = vsel %vm427, %v420, %v424
          %v429 = vand.u32 2147483647, %v388
          %vm430 = vcmp.eq.f32.partialorder %v429, 8.507059e+37
          %v431 = vand.u32 %v388, 2147483648
          %v432 = vor.u32 1.1754944e-38, %v431
          %v433 = vsel %vm430, %v432, %v428
          %v434 = vmul.f32 %v348, %v433
          %v435 = vrcp.pop %v389
          %v436 = vmul.f32 %v389, %v435
          %v437 = vsub.f32 1.0, %v436
          %v438 = vmul.f32 %v435, %v437
          %v439 = vadd.f32 %v435, %v438
          %vm440 = vweird.f32 %v389
          %vm441 = vweird.f32 %v435
          %vm442 = vmor %vm440, %vm441
          %v443 = vsel %vm442, %v435, %v439
          %v444 = vand.u32 2147483647, %v389
          %vm445 = vcmp.eq.f32.partialorder %v444, 8.507059e+37
          %v446 = vand.u32 %v389, 2147483648
          %v447 = vor.u32 1.1754944e-38, %v446
          %v448 = vsel %vm445, %v447, %v443
          %v449 = vmul.f32 %v349, %v448
          %v450 = vlog2.pop %v294
          %v451 = vmul.f32 %v450, 0.6931472
          %v452 = vlog2.pop %v295
          %v453 = vmul.f32 %v452, 0.6931472
          %v454 = vlog2.pop %v296
          %v455 = vmul.f32 %v454, 0.6931472
          %v456 = vlog2.pop %v297
          %v457 = vmul.f32 %v456, 0.6931472
          %v458 = vmul.f32 %v451, -2.0
          %v459 = vmul.f32 %v453, -2.0
          %v460 = vmul.f32 %v455, -2.0
          %v461 = vmul.f32 %v457, -2.0
          %v462 = vrsqrt.pop %v458
          %v463 = vmul.f32 %v462, %v458
          %v464 = vmul.f32 %v463, %v462
          %v465 = vmul.f32 0.5, %v464
          %v466 = vsub.f32 1.5, %v465
          %v467 = vmul.f32 %v462, %v466
          %v468 = vmul.f32 %v458, %v467
          %vm469 = vcmp.eq.f32.partialorder %v458, inf
          %v470 = vsel %vm469, %v458, %v468
          %vm471 = vcmp.eq.f32.partialorder %v458, 0.0
          %v472 = vand.u32 %v458, 2147483648
          %v473 = vsel %vm471, %v472, %v470
          %v474 = vrsqrt.pop %v459
          %v475 = vmul.f32 %v474, %v459
          %v476 = vmul.f32 %v475, %v474
          %v477 = vmul.f32 0.5, %v476
          %v478 = vsub.f32 1.5, %v477
          %v479 = vmul.f32 %v474, %v478
          %v480 = vmul.f32 %v459, %v479
          %vm481 = vcmp.eq.f32.partialorder %v459, inf
          %v482 = vsel %vm481, %v459, %v480
          %vm483 = vcmp.eq.f32.partialorder %v459, 0.0
          %v484 = vand.u32 %v459, 2147483648
          %v485 = vsel %vm483, %v484, %v482
          %v486 = vrsqrt.pop %v460
          %v487 = vmul.f32 %v486, %v460
          %v488 = vmul.f32 %v487, %v486
          %v489 = vmul.f32 0.5, %v488
          %v490 = vsub.f32 1.5, %v489
          %v491 = vmul.f32 %v486, %v490
          %v492 = vmul.f32 %v460, %v491
          %vm493 = vcmp.eq.f32.partialorder %v460, inf
          %v494 = vsel %vm493, %v460, %v492
          %vm495 = vcmp.eq.f32.partialorder %v460, 0.0
          %v496 = vand.u32 %v460, 2147483648
          %v497 = vsel %vm495, %v496, %v494
          %v498 = vrsqrt.pop %v461
          %v499 = vmul.f32 %v498, %v461
          %v500 = vmul.f32 %v499, %v498
          %v501 = vmul.f32 0.5, %v500
          %v502 = vsub.f32 1.5, %v501
          %v503 = vmul.f32 %v498, %v502
          %v504 = vmul.f32 %v461, %v503
          %vm505 = vcmp.eq.f32.partialorder %v461, inf
          %v506 = vsel %vm505, %v461, %v504
          %vm507 = vcmp.eq.f32.partialorder %v461, 0.0
          %v508 = vand.u32 %v461, 2147483648
          %v509 = vsel %vm507, %v508, %v506
          %v510 = vmul.f32 %v473, -0.007784894
          %v511 = vmul.f32 %v485, -0.007784894
          %v512 = vmul.f32 %v497, -0.007784894
          %v513 = vmul.f32 %v509, -0.007784894
          %v514 = vadd.f32 %v510, -0.32239646
          %v515 = vadd.f32 %v511, -0.32239646
          %v516 = vadd.f32 %v512, -0.32239646
          %v517 = vadd.f32 %v513, -0.32239646
          %v518 = vmul.f32 %v514, %v473
          %v519 = vmul.f32 %v515, %v485
          %v520 = vmul.f32 %v516, %v497
          %v521 = vmul.f32 %v517, %v509
          %v522 = vadd.f32 %v518, -2.4007583
          %v523 = vadd.f32 %v519, -2.4007583
          %v524 = vadd.f32 %v520, -2.4007583
          %v525 = vadd.f32 %v521, -2.4007583
          %v526 = vmul.f32 %v522, %v473
          %v527 = vmul.f32 %v523, %v485
          %v528 = vmul.f32 %v524, %v497
          %v529 = vmul.f32 %v525, %v509
          %v530 = vadd.f32 %v526, -2.5497324
          %v531 = vadd.f32 %v527, -2.5497324
          %v532 = vadd.f32 %v528, -2.5497324
          %v533 = vadd.f32 %v529, -2.5497324
          %v534 = vmul.f32 %v530, %v473
          %v535 = vmul.f32 %v531, %v485
          %v536 = vmul.f32 %v532, %v497
          %v537 = vmul.f32 %v533, %v509
          %v538 = vadd.f32 %v534, 4.3746643
          %v539 = vadd.f32 %v535, 4.3746643
          %v540 = vadd.f32 %v536, 4.3746643
          %v541 = vadd.f32 %v537, 4.3746643
          %v542 = vmul.f32 %v538, %v473
          %v543 = vmul.f32 %v539, %v485
          %v544 = vmul.f32 %v540, %v497
          %v545 = vmul.f32 %v541, %v509
          %v546 = vadd.f32 %v542, 2.938164
          %v547 = vadd.f32 %v543, 2.938164
          %v548 = vadd.f32 %v544, 2.938164
          %v549 = vadd.f32 %v545, 2.938164
          %v550 = vmul.f32 %v473, 0.007784696
          %v551 = vmul.f32 %v485, 0.007784696
          %v552 = vmul.f32 %v497, 0.007784696
          %v553 = vmul.f32 %v509, 0.007784696
          %v554 = vadd.f32 %v550, 0.32246712
          %v555 = vadd.f32 %v551, 0.32246712
          %v556 = vadd.f32 %v552, 0.32246712
          %v557 = vadd.f32 %v553, 0.32246712
          %v558 = vmul.f32 %v554, %v473
          %v559 = vmul.f32 %v555, %v485
          %v560 = vmul.f32 %v556, %v497
          %v561 = vmul.f32 %v557, %v509
          %v562 = vadd.f32 %v558, 2.4451342
          %v563 = vadd.f32 %v559, 2.4451342
          %v564 = vadd.f32 %v560, 2.4451342
          %v565 = vadd.f32 %v561, 2.4451342
          %v566 = vmul.f32 %v562, %v473
          %v567 = vmul.f32 %v563, %v485
          %v568 = vmul.f32 %v564, %v497
          %v569 = vmul.f32 %v565, %v509
          %v570 = vadd.f32 %v566, 3.7544086
          %v571 = vadd.f32 %v567, 3.7544086
          %v572 = vadd.f32 %v568, 3.7544086
          %v573 = vadd.f32 %v569, 3.7544086
          %v574 = vmul.f32 %v570, %v473
          %v575 = vmul.f32 %v571, %v485
          %v576 = vmul.f32 %v572, %v497
          %v577 = vmul.f32 %v573, %v509
          %v578 = vadd.f32 %v574, 1.0
          %v579 = vadd.f32 %v575, 1.0
          %v580 = vadd.f32 %v576, 1.0
          %v581 = vadd.f32 %v577, 1.0
          %v582 = vrcp.pop %v578
          %v583 = vmul.f32 %v578, %v582
          %v584 = vsub.f32 1.0, %v583
          %v585 = vmul.f32 %v582, %v584
          %v586 = vadd.f32 %v582, %v585
          %vm587 = vweird.f32 %v578
          %vm588 = vweird.f32 %v582
          %vm589 = vmor %vm587, %vm588
          %v590 = vsel %vm589, %v582, %v586
          %v591 = vand.u32 2147483647, %v578
          %vm592 = vcmp.eq.f32.partialorder %v591, 8.507059e+37
          %v593 = vand.u32 %v578, 2147483648
          %v594 = vor.u32 1.1754944e-38, %v593
          %v595 = vsel %vm592, %v594, %v590
          %v596 = vmul.f32 %v546, %v595
          %v597 = vrcp.pop %v579
          %v598 = vmul.f32 %v579, %v597
          %v599 = vsub.f32 1.0, %v598
          %v600 = vmul.f32 %v597, %v599
          %v601 = vadd.f32 %v597, %v600
          %vm602 = vweird.f32 %v579
          %vm603 = vweird.f32 %v597
          %vm604 = vmor %vm602, %vm603
          %v605 = vsel %vm604, %v597, %v601
          %v606 = vand.u32 2147483647, %v579
          %vm607 = vcmp.eq.f32.partialorder %v606, 8.507059e+37
          %v608 = vand.u32 %v579, 2147483648
          %v609 = vor.u32 1.1754944e-38, %v608
          %v610 = vsel %vm607, %v609, %v605
          %v611 = vmul.f32 %v547, %v610
          %v612 = vrcp.pop %v580
          %v613 = vmul.f32 %v580, %v612
          %v614 = vsub.f32 1.0, %v613
          %v615 = vmul.f32 %v612, %v614
          %v616 = vadd.f32 %v612, %v615
          %vm617 = vweird.f32 %v580
          %vm618 = vweird.f32 %v612
          %vm619 = vmor %vm617, %vm618
          %v620 = vsel %vm619, %v612, %v616
          %v621 = vand.u32 2147483647, %v580
          %vm622 = vcmp.eq.f32.partialorder %v621, 8.507059e+37
          %v623 = vand.u32 %v580, 2147483648
          %v624 = vor.u32 1.1754944e-38, %v623
          %v625 = vsel %vm622, %v624, %v620
          %v626 = vmul.f32 %v548, %v625
          %v627 = vrcp.pop %v581
          %v628 = vmul.f32 %v581, %v627
          %v629 = vsub.f32 1.0, %v628
          %v630 = vmul.f32 %v627, %v629
          %v631 = vadd.f32 %v627, %v630
          %vm632 = vweird.f32 %v581
          %vm633 = vweird.f32 %v627
          %vm634 = vmor %vm632, %vm633
          %v635 = vsel %vm634, %v627, %v631
          %v636 = vand.u32 2147483647, %v581
          %vm637 = vcmp.eq.f32.partialorder %v636, 8.507059e+37
          %v638 = vand.u32 %v581, 2147483648
          %v639 = vor.u32 1.1754944e-38, %v638
          %v640 = vsel %vm637, %v639, %v635
          %v641 = vmul.f32 %v549, %v640
          %v642 = vsub.f32 1.0, %v294
          %v643 = vsub.f32 1.0, %v295
          %v644 = vsub.f32 1.0, %v296
          %v645 = vsub.f32 1.0, %v297
          %v646 = vlog2.pop %v642
          %v647 = vmul.f32 %v646, 0.6931472
          %v648 = vlog2.pop %v643
          %v649 = vmul.f32 %v648, 0.6931472
          %v650 = vlog2.pop %v644
          %v651 = vmul.f32 %v650, 0.6931472
          %v652 = vlog2.pop %v645
          %v653 = vmul.f32 %v652, 0.6931472
          %v654 = vmul.f32 %v647, -2.0
          %v655 = vmul.f32 %v649, -2.0
          %v656 = vmul.f32 %v651, -2.0
          %v657 = vmul.f32 %v653, -2.0
          %v658 = vrsqrt.pop %v654
          %v659 = vmul.f32 %v658, %v654
          %v660 = vmul.f32 %v659, %v658
          %v661 = vmul.f32 0.5, %v660
          %v662 = vsub.f32 1.5, %v661
          %v663 = vmul.f32 %v658, %v662
          %v664 = vmul.f32 %v654, %v663
          %vm665 = vcmp.eq.f32.partialorder %v654, inf
          %v666 = vsel %vm665, %v654, %v664
          %vm667 = vcmp.eq.f32.partialorder %v654, 0.0
          %v668 = vand.u32 %v654, 2147483648
          %v669 = vsel %vm667, %v668, %v666
          %v670 = vrsqrt.pop %v655
          %v671 = vmul.f32 %v670, %v655
          %v672 = vmul.f32 %v671, %v670
          %v673 = vmul.f32 0.5, %v672
          %v674 = vsub.f32 1.5, %v673
          %v675 = vmul.f32 %v670, %v674
          %v676 = vmul.f32 %v655, %v675
          %vm677 = vcmp.eq.f32.partialorder %v655, inf
          %v678 = vsel %vm677, %v655, %v676
          %vm679 = vcmp.eq.f32.partialorder %v655, 0.0
          %v680 = vand.u32 %v655, 2147483648
          %v681 = vsel %vm679, %v680, %v678
          %v682 = vrsqrt.pop %v656
          %v683 = vmul.f32 %v682, %v656
          %v684 = vmul.f32 %v683, %v682
          %v685 = vmul.f32 0.5, %v684
          %v686 = vsub.f32 1.5, %v685
          %v687 = vmul.f32 %v682, %v686
          %v688 = vmul.f32 %v656, %v687
          %vm689 = vcmp.eq.f32.partialorder %v656, inf
          %v690 = vsel %vm689, %v656, %v688
          %vm691 = vcmp.eq.f32.partialorder %v656, 0.0
          %v692 = vand.u32 %v656, 2147483648
          %v693 = vsel %vm691, %v692, %v690
          %v694 = vrsqrt.pop %v657
          %v695 = vmul.f32 %v694, %v657
          %v696 = vmul.f32 %v695, %v694
          %v697 = vmul.f32 0.5, %v696
          %v698 = vsub.f32 1.5, %v697
          %v699 = vmul.f32 %v694, %v698
          %v700 = vmul.f32 %v657, %v699
          %vm701 = vcmp.eq.f32.partialorder %v657, inf
          %v702 = vsel %vm701, %v657, %v700
          %vm703 = vcmp.eq.f32.partialorder %v657, 0.0
          %v704 = vand.u32 %v657, 2147483648
          %v705 = vsel %vm703, %v704, %v702
          %v706 = vmul.f32 %v669, -0.007784894
          %v707 = vmul.f32 %v681, -0.007784894
          %v708 = vmul.f32 %v693, -0.007784894
          %v709 = vmul.f32 %v705, -0.007784894
          %v710 = vadd.f32 %v706, -0.32239646
          %v711 = vadd.f32 %v707, -0.32239646
          %v712 = vadd.f32 %v708, -0.32239646
          %v713 = vadd.f32 %v709, -0.32239646
          %v714 = vmul.f32 %v710, %v669
          %v715 = vmul.f32 %v711, %v681
          %v716 = vmul.f32 %v712, %v693
          %v717 = vmul.f32 %v713, %v705
          %v718 = vadd.f32 %v714, -2.4007583
          %v719 = vadd.f32 %v715, -2.4007583
          %v720 = vadd.f32 %v716, -2.4007583
          %v721 = vadd.f32 %v717, -2.4007583
          %v722 = vmul.f32 %v718, %v669
          %v723 = vmul.f32 %v719, %v681
          %v724 = vmul.f32 %v720, %v693
          %v725 = vmul.f32 %v721, %v705
          %v726 = vadd.f32 %v722, -2.5497324
          %v727 = vadd.f32 %v723, -2.5497324
          %v728 = vadd.f32 %v724, -2.5497324
          %v729 = vadd.f32 %v725, -2.5497324
          %v730 = vmul.f32 %v726, %v669
          %v731 = vmul.f32 %v727, %v681
          %v732 = vmul.f32 %v728, %v693
          %v733 = vmul.f32 %v729, %v705
          %v734 = vadd.f32 %v730, 4.3746643
          %v735 = vadd.f32 %v731, 4.3746643
          %v736 = vadd.f32 %v732, 4.3746643
          %v737 = vadd.f32 %v733, 4.3746643
          %v738 = vmul.f32 %v734, %v669
          %v739 = vmul.f32 %v735, %v681
          %v740 = vmul.f32 %v736, %v693
          %v741 = vmul.f32 %v737, %v705
          %v742 = vadd.f32 %v738, 2.938164
          %v743 = vadd.f32 %v739, 2.938164
          %v744 = vadd.f32 %v740, 2.938164
          %v745 = vadd.f32 %v741, 2.938164
          %v746 = vsub.f32 0.0, %v742
          %v747 = vsub.f32 0.0, %v743
          %v748 = vsub.f32 0.0, %v744
          %v749 = vsub.f32 0.0, %v745
          %v750 = vmul.f32 %v669, 0.007784696
          %v751 = vmul.f32 %v681, 0.007784696
          %v752 = vmul.f32 %v693, 0.007784696
          %v753 = vmul.f32 %v705, 0.007784696
          %v754 = vadd.f32 %v750, 0.32246712
          %v755 = vadd.f32 %v751, 0.32246712
          %v756 = vadd.f32 %v752, 0.32246712
          %v757 = vadd.f32 %v753, 0.32246712
          %v758 = vmul.f32 %v754, %v669
          %v759 = vmul.f32 %v755, %v681
          %v760 = vmul.f32 %v756, %v693
          %v761 = vmul.f32 %v757, %v705
          %v762 = vadd.f32 %v758, 2.4451342
          %v763 = vadd.f32 %v759, 2.4451342
          %v764 = vadd.f32 %v760, 2.4451342
          %v765 = vadd.f32 %v761, 2.4451342
          %v766 = vmul.f32 %v762, %v669
          %v767 = vmul.f32 %v763, %v681
          %v768 = vmul.f32 %v764, %v693
          %v769 = vmul.f32 %v765, %v705
          %v770 = vadd.f32 %v766, 3.7544086
          %v771 = vadd.f32 %v767, 3.7544086
          %v772 = vadd.f32 %v768, 3.7544086
          %v773 = vadd.f32 %v769, 3.7544086
          %v774 = vmul.f32 %v770, %v669
          %v775 = vmul.f32 %v771, %v681
          %v776 = vmul.f32 %v772, %v693
          %v777 = vmul.f32 %v773, %v705
          %v778 = vadd.f32 %v774, 1.0
          %v779 = vadd.f32 %v775, 1.0
          %v780 = vadd.f32 %v776, 1.0
          %v781 = vadd.f32 %v777, 1.0
          %v782 = vrcp.pop %v778
          %v783 = vmul.f32 %v778, %v782
          %v784 = vsub.f32 1.0, %v783
          %v785 = vmul.f32 %v782, %v784
          %v786 = vadd.f32 %v782, %v785
          %vm787 = vweird.f32 %v778
          %vm788 = vweird.f32 %v782
          %vm789 = vmor %vm787, %vm788
          %v790 = vsel %vm789, %v782, %v786
          %v791 = vand.u32 2147483647, %v778
          %vm792 = vcmp.eq.f32.partialorder %v791, 8.507059e+37
          %v793 = vand.u32 %v778, 2147483648
          %v794 = vor.u32 1.1754944e-38, %v793
          %v795 = vsel %vm792, %v794, %v790
          %v796 = vmul.f32 %v746, %v795
          %v797 = vrcp.pop %v779
          %v798 = vmul.f32 %v779, %v797
          %v799 = vsub.f32 1.0, %v798
          %v800 = vmul.f32 %v797, %v799
          %v801 = vadd.f32 %v797, %v800
          %vm802 = vweird.f32 %v779
          %vm803 = vweird.f32 %v797
          %vm804 = vmor %vm802, %vm803
          %v805 = vsel %vm804, %v797, %v801
          %v806 = vand.u32 2147483647, %v779
          %vm807 = vcmp.eq.f32.partialorder %v806, 8.507059e+37
          %v808 = vand.u32 %v779, 2147483648
          %v809 = vor.u32 1.1754944e-38, %v808
          %v810 = vsel %vm807, %v809, %v805
          %v811 = vmul.f32 %v747, %v810
          %v812 = vrcp.pop %v780
          %v813 = vmul.f32 %v780, %v812
          %v814 = vsub.f32 1.0, %v813
          %v815 = vmul.f32 %v812, %v814
          %v816 = vadd.f32 %v812, %v815
          %vm817 = vweird.f32 %v780
          %vm818 = vweird.f32 %v812
          %vm819 = vmor %vm817, %vm818
          %v820 = vsel %vm819, %v812, %v816
          %v821 = vand.u32 2147483647, %v780
          %vm822 = vcmp.eq.f32.partialorder %v821, 8.507059e+37
          %v823 = vand.u32 %v780, 2147483648
          %v824 = vor.u32 1.1754944e-38, %v823
          %v825 = vsel %vm822, %v824, %v820
          %v826 = vmul.f32 %v748, %v825
          %v827 = vrcp.pop %v781
          %v828 = vmul.f32 %v781, %v827
          %v829 = vsub.f32 1.0, %v828
          %v830 = vmul.f32 %v827, %v829
          %v831 = vadd.f32 %v827, %v830
          %vm832 = vweird.f32 %v781
          %vm833 = vweird.f32 %v827
          %vm834 = vmor %vm832, %vm833
          %v835 = vsel %vm834, %v827, %v831
          %v836 = vand.u32 2147483647, %v781
          %vm837 = vcmp.eq.f32.partialorder %v836, 8.507059e+37
          %v838 = vand.u32 %v781, 2147483648
          %v839 = vor.u32 1.1754944e-38, %v838
          %v840 = vsel %vm837, %v839, %v835
          %v841 = vmul.f32 %v749, %v840
          %vm842 = vcmp.lt.f32.partialorder %v294, 0.02425
          %vm843 = vcmp.lt.f32.partialorder %v295, 0.02425
          %vm844 = vcmp.lt.f32.partialorder %v296, 0.02425
          %vm845 = vcmp.lt.f32.partialorder %v297, 0.02425
          %vm846 = vcmp.lt.f32.partialorder %v642, 0.02425
          %vm847 = vcmp.lt.f32.partialorder %v643, 0.02425
          %vm848 = vcmp.lt.f32.partialorder %v644, 0.02425
          %vm849 = vcmp.lt.f32.partialorder %v645, 0.02425
          %v850 = vsel %vm846, %v796, %v404
          %v851 = vsel %vm847, %v811, %v419
          %v852 = vsel %vm848, %v826, %v434
          %v853 = vsel %vm849, %v841, %v449
          %v854 = vsel %vm842, %v596, %v850
          %v855 = vsel %vm843, %v611, %v851
          %v856 = vsel %vm844, %v626, %v852
          %v857 = vsel %vm845, %v641, %v853
          %v858 = vmul.f32 %v197, %v854
          %v859 = vmul.f32 %v198, %v855
          %v860 = vmul.f32 %v199, %v856
          %v861 = vmul.f32 %v200, %v857
          %v862 = vadd.f32 %v157, %v858
          %v863 = vadd.f32 %v158, %v859
          %v864 = vadd.f32 %v159, %v860
          %v865 = vadd.f32 %v160, %v861
          %s866 = smul.u32 %s218, 32
          %s867 = scalar_lea.vmem %s155, %s866 [#allocation7]
          %868 = vst [vmem:[%s867] sm:$0xff] %v862
          %869 = vst [vmem:[%s867 + $0x8] sm:$0xff] %v863
          %870 = vst [vmem:[%s867 + $0x10] sm:$0xff] %v864
          %871 = vst [vmem:[%s867 + $0x18] sm:$0xff] %v865
        $region41: #{tpu_custom_call.1} parent=27 // loop_footer
          %s222 = sadd.s32 1, %s218
        $region42: #{tpu_custom_call.1} parent=27 // loop_footer_branch
          %217 = sbr.rel target = $region38
        $region43: #{tpu_custom_call.1} parent=27 // loop_exit
          _
        %s872 = sand.u32 %s68, 1
        %s873 = scalar_lea.sflag [#allocation4], %s872
        %s874 = sand.u32 %s68, 1
        %s875 = smul.addr %s874, 128
        %s876 = scalar_lea.vmem [#allocation7], %s875
        // Predicated region
        $region44: #{tpu_custom_call.1} parent=27 // pred_check
          %p877 = pneg %p78
        $region45: #{tpu_custom_call.1} parent=27 // pred_check_branch
          %879 = sbr.rel (%p877) target = $region47
        $region46: #{tpu_custom_call.1} parent=27 // pred_region
          %s880 = smul.u32 4, %s18
          %882 = vsyncadd %s873, 0
          %s883 = smul.addr %s880, 4
          %s884 = smul.addr %s883, 8
          %s885 = scalar_lea.hbm %s2, %s884
          %s886 = sshll.u32 %s876, 4
          %s887 = int_to_ptr.vmem [resolvable:$true] %s886
          %s888 = sshll.u32 %s885, 4
          %s889 = int_to_ptr.hbm [resolvable:$true] %s888
          %894 = dma.vmem_to_hbm [thread:$0]  %s887, 2048, %s889, %s873, 128, 128, 8
        $region47: #{tpu_custom_call.1} parent=27 // pred_fallthru
          _
      $region28: #{tpu_custom_call.1} parent=5 // pred_fallthru
        _
      %p895 = scmp.le.s32.totalorder 2, %s13
      // Predicated region
      $region48: #{tpu_custom_call.1} parent=5 // pred_check
        %p896 = pneg %p895
      $region49: #{tpu_custom_call.1} parent=5 // pred_check_branch
        %898 = sbr.rel (%p896) target = $region51
      $region50: #{tpu_custom_call.1} parent=5 // pred_region
        %s899 = ssub.s32 %s13, 2
        // Predicated region
        $region52: #{tpu_custom_call.1} parent=50 // pred_check
          %p900 = pneg %p84
        $region53: #{tpu_custom_call.1} parent=50 // pred_check_branch
          %902 = sbr.rel (%p900) target = $region55
        $region54: #{tpu_custom_call.1} parent=50 // pred_region
          %s903 = sand.u32 %s69, 1
          %s904 = scalar_lea.sflag [#allocation4], %s903
          %s905 = sand.u32 %s69, 1
          %s906 = smul.addr %s905, 128
          %s907 = scalar_lea.vmem [#allocation7], %s906
          %909 = dma.done %s904, 2048
        $region55: #{tpu_custom_call.1} parent=50 // pred_fallthru
          _
      $region51: #{tpu_custom_call.1} parent=5 // pred_fallthru
        _
    $region6: #{tpu_custom_call.1} parent=1 // loop_footer
      %s17 = sadd.s32 1, %s13
    $region7: #{tpu_custom_call.1} parent=1 // loop_footer_branch
      %12 = sbr.rel target = $region3
    $region8: #{tpu_custom_call.1} parent=1 // loop_exit
      _
    %910 = vsyncpa [#allocation3], 1
    %s911 = scalar_lea.sflag [#allocation3], 1
    %912 = vsyncpa %s911, 1
    %913 = vsyncpa [#allocation6], 1
    %914 = vsyncpa [#allocation4], 1
    %s915 = scalar_lea.sflag [#allocation4], 1
    %916 = vsyncpa %s915, 1

</llo_original>
